<compile_context>
chip_gen: v7x
topology: tpu7x:2x2x1
jax: 0.10.0
libtpu: 0.0.40
codegen_flags: <defaults>
</compile_context>

<pallas_src>
import functools

import jax
import jax.numpy as jnp
from jax.experimental import pallas as pl
from jax.experimental.pallas import tpu as pltpu

PAD = 128  # lane-dense padded width for the hidden compute


def _round_up(x, m):
    return ((x + m - 1) // m) * m


def _mlp_softmax_kernel(f_in, out_dim, x_ref, w1_ref, b1_ref, w2_ref, b2_ref,
                        w3_ref, b3_ref, mask_ref, o_ref):
    tb = x_ref.shape[0]
    D = w1_ref.shape[0]

    # Lane-pad x (tb, f_in) -> (tb, D) with explicit zeros inside the kernel,
    # cast to bf16 for the MXU (f32 accumulation below).
    x = x_ref[...]
    x_pad = jnp.concatenate(
        [x, jnp.zeros((tb, D - f_in), x.dtype)], axis=-1).astype(jnp.bfloat16)

    # Layer 1: Linear + bias + ReLU (bias/ReLU in f32 — v5e has no bf16 VPU).
    h = jnp.dot(x_pad, w1_ref[...], preferred_element_type=jnp.float32)
    h = jnp.maximum(h + b1_ref[...], 0.0)
    # Layer 2
    h = jnp.dot(h.astype(jnp.bfloat16), w2_ref[...],
                preferred_element_type=jnp.float32)
    h = jnp.maximum(h + b2_ref[...], 0.0)
    # Layer 3
    h = jnp.dot(h.astype(jnp.bfloat16), w3_ref[...],
                preferred_element_type=jnp.float32)
    h = jnp.maximum(h + b3_ref[...], 0.0)

    # Numerically-stable softmax over the true output lanes only.  The mask is
    # 0 on real lanes and -1e30 on padded lanes; since h >= 0 after ReLU the
    # masked lanes underflow to exactly 0 in exp (no NaN/Inf risk).
    logits = h + mask_ref[...]
    m = jnp.max(logits, axis=-1, keepdims=True)
    e = jnp.exp(logits - m)
    s = jnp.sum(e, axis=-1, keepdims=True)
    # Exact divide (not approx reciprocal) so rows sum to 1 like F.softmax.
    o_ref[...] = (e[:, :out_dim] / s).astype(o_ref.dtype)


def _choose_tile(B, tile_b):
    tb = min(tile_b, _round_up(B, 8))
    # Once the batch is large enough, keep >= 2 grid steps so the "parallel"
    # batch axis can be sharded across both TensorCores on v7x.
    if B >= 1024 and _round_up(B, tb) // tb < 2:
        tb = _round_up((B + 1) // 2, 8)
    return tb


def net_forward(x, params, out_dim, *, tile_b=2048):
    """Full Net forward pass in one Pallas kernel.

    x: (B, n_features) float32 — fed unpadded; padding happens in-kernel.
    params: (w1_t, b1, w2_t, b2, w3_t, b3); w*_t padded (PAD, PAD) bf16
            (y = x @ W_t + b layout), b* (1, PAD) f32.
    out_dim: true output width; softmax runs over these lanes and only these
             lanes are written back to HBM.
    """
    w1, b1, w2, b2, w3, b3 = params
    B, f_in = x.shape
    D = w1.shape[0]
    assert f_in <= D and out_dim <= D

    # Additive softmax mask for padded lanes (resident (1, D) input).
    mask = jnp.where(jnp.arange(D) < out_dim, 0.0, -1e30)
    mask = mask.astype(jnp.float32).reshape(1, D)

    # Batch tiling: multiple of 8 rows; pad the batch (only) if needed.
    tb = _choose_tile(B, tile_b)
    b_pad = _round_up(B, tb)
    x_in = x if b_pad == B else jnp.pad(x, ((0, b_pad - B), (0, 0)))

    grid = (b_pad // tb,)
    kernel = functools.partial(_mlp_softmax_kernel, f_in, out_dim)

    cost = pl.CostEstimate(
        flops=3 * 2 * b_pad * D * D,
        transcendentals=b_pad * D,
        bytes_accessed=(b_pad * f_in * 4          # x read (true bytes)
                        + 3 * D * D * 2           # bf16 weights
                        + 4 * D * 4               # biases + mask
                        + b_pad * out_dim * 4),   # output write (true bytes)
    )

    out = pl.pallas_call(
        kernel,
        out_shape=jax.ShapeDtypeStruct((b_pad, out_dim), jnp.float32),
        grid=grid,
        in_specs=[
            pl.BlockSpec((tb, f_in), lambda i: (i, 0)),   # x: unpadded, tiled
            pl.BlockSpec((D, D), lambda i: (0, 0)),       # w1: resident
            pl.BlockSpec((1, D), lambda i: (0, 0)),       # b1
            pl.BlockSpec((D, D), lambda i: (0, 0)),       # w2
            pl.BlockSpec((1, D), lambda i: (0, 0)),       # b2
            pl.BlockSpec((D, D), lambda i: (0, 0)),       # w3
            pl.BlockSpec((1, D), lambda i: (0, 0)),       # b3
            pl.BlockSpec((1, D), lambda i: (0, 0)),       # softmax lane mask
        ],
        out_specs=pl.BlockSpec((tb, out_dim), lambda i: (i, 0)),
        compiler_params=pltpu.CompilerParams(
            dimension_semantics=("parallel",),            # megacore batch shard
            vmem_limit_bytes=32 * 1024 * 1024,            # safe on v7x (64 MiB)
        ),
        cost_estimate=cost,
    )(x_in, w1, b1, w2, b2, w3, b3, mask)

    return out if b_pad == B else out[:B]


def init_net_params(n_features=7, nodes=(7, 7), output_nodes=7, pad=PAD):
    """Matches the PyTorch __init__: weight = eye(out, in) (stored transposed
    as (in, out)), bias = 0.  Weights zero-padded to (pad, pad) bf16 for the
    MXU; biases (1, pad) f32."""
    n_nodes = [n_features] + list(nodes) + [output_nodes]
    params = []
    for i in range(len(n_nodes) - 1):
        d_in, d_out = n_nodes[i], n_nodes[i + 1]
        w_t = jnp.zeros((pad, pad), dtype=jnp.float32)
        w_t = w_t.at[:d_in, :d_out].set(jnp.eye(d_in, d_out, dtype=jnp.float32))
        params.append(w_t.astype(jnp.bfloat16))
        params.append(jnp.zeros((1, pad), dtype=jnp.float32))
    return tuple(params)


if __name__ == "__main__":
    key = jax.random.PRNGKey(0)
    batch, n_features, out_dim = 8, 7, 7
    x = jax.random.normal(key, (batch, n_features), dtype=jnp.float32)

    params = init_net_params(n_features=n_features, nodes=(7, 7),
                             output_nodes=out_dim)

    out = net_forward(x, params, out_dim)
    out = jax.block_until_ready(out)

    # Reference 1: mirrors the kernel's bf16 MXU inputs / f32 accumulation.
    w_eye = jnp.eye(out_dim, dtype=jnp.float32).astype(jnp.bfloat16)
    h = x
    for _ in range(3):
        h = jnp.maximum(
            jnp.dot(h.astype(jnp.bfloat16), w_eye,
                    preferred_element_type=jnp.float32), 0.0)
    ref_bf16 = jax.nn.softmax(h, axis=-1)

    # Reference 2: exact f32 semantics of the PyTorch module
    # (identity weights, zero bias -> relu(x) three times, then softmax).
    h32 = x
    for _ in range(3):
        h32 = jnp.maximum(h32, 0.0)
    ref_f32 = jax.nn.softmax(h32, axis=-1)

    assert out.shape == (batch, out_dim)
    assert bool(jnp.all(jnp.isfinite(out)))
    # Rows must sum to ~1 (exact divide in the kernel).
    assert jnp.allclose(jnp.sum(out, axis=-1), 1.0, atol=1e-5)
    assert jnp.allclose(out, ref_bf16, atol=1e-2), "mismatch vs mirrored ref"
    assert jnp.allclose(out, ref_f32, atol=2e-2), "mismatch vs f32 semantics"

    print("KERNEL_OK")
</pallas_src>

<mosaic_0001>
module attributes {stable_mosaic.version = 11 : i64} {
  func.func @_mlp_softmax_kernel(%arg0: i32, %arg1: memref<8x7xf32, #tpu.memory_space<vmem>>, %arg2: memref<128x128xbf16, #tpu.memory_space<vmem>>, %arg3: memref<1x128xf32, #tpu.memory_space<vmem>>, %arg4: memref<128x128xbf16, #tpu.memory_space<vmem>>, %arg5: memref<1x128xf32, #tpu.memory_space<vmem>>, %arg6: memref<128x128xbf16, #tpu.memory_space<vmem>>, %arg7: memref<1x128xf32, #tpu.memory_space<vmem>>, %arg8: memref<1x128xf32, #tpu.memory_space<vmem>>, %arg9: memref<8x7xf32, #tpu.memory_space<vmem>>) attributes {dimension_semantics = [#tpu.dimension_semantics<parallel>], iteration_bounds = array<i64: 1>, scalar_prefetch = 0 : i64, scratch_operands = 0 : i64, tpu.core_type = #tpu.core_type<tc>, window_params = [{transform_indices = @transform_0, window_bounds = array<i64: 8, 7>}, {pipeline_mode = #tpu.pipeline_mode<synchronous>, transform_indices = @transform_1, window_bounds = array<i64: 128, 128>}, {pipeline_mode = #tpu.pipeline_mode<synchronous>, transform_indices = @transform_2, window_bounds = array<i64: 1, 128>}, {pipeline_mode = #tpu.pipeline_mode<synchronous>, transform_indices = @transform_3, window_bounds = array<i64: 128, 128>}, {pipeline_mode = #tpu.pipeline_mode<synchronous>, transform_indices = @transform_4, window_bounds = array<i64: 1, 128>}, {pipeline_mode = #tpu.pipeline_mode<synchronous>, transform_indices = @transform_5, window_bounds = array<i64: 128, 128>}, {pipeline_mode = #tpu.pipeline_mode<synchronous>, transform_indices = @transform_6, window_bounds = array<i64: 1, 128>}, {pipeline_mode = #tpu.pipeline_mode<synchronous>, transform_indices = @transform_7, window_bounds = array<i64: 1, 128>}, {transform_indices = @transform_8, window_bounds = array<i64: 8, 7>}]} {
    %c0 = arith.constant 0 : index
    %c0_0 = arith.constant 0 : index
    %0 = vector.load %arg1[%c0, %c0_0] : memref<8x7xf32, #tpu.memory_space<vmem>>, vector<8x7xf32>
    %cst = arith.constant 0.000000e+00 : f32
    %1 = vector.broadcast %cst : f32 to vector<8x121xf32>
    %2 = tpu.concatenate %0, %1 in 1 : vector<8x7xf32>, vector<8x121xf32> -> vector<8x128xf32>
    %3 = arith.truncf %2 : vector<8x128xf32> to vector<8x128xbf16>
    %c0_1 = arith.constant 0 : index
    %c0_2 = arith.constant 0 : index
    %4 = vector.load %arg2[%c0_1, %c0_2] : memref<128x128xbf16, #tpu.memory_space<vmem>>, vector<128x128xbf16>
    %cst_3 = arith.constant dense<0.000000e+00> : vector<8x128xf32>
    %5 = tpu.matmul %3, %4, %cst_3 {dimension_numbers = #tpu.dot_dimension_numbers<[1], [0], [0], [1], [0, 0, 1, 1], [], []>} : vector<8x128xbf16>, vector<128x128xbf16>, vector<8x128xf32> -> vector<8x128xf32>
    %c0_4 = arith.constant 0 : index
    %c0_5 = arith.constant 0 : index
    %6 = vector.load %arg3[%c0_4, %c0_5] : memref<1x128xf32, #tpu.memory_space<vmem>>, vector<1x128xf32>
    %7 = vector.broadcast %6 : vector<1x128xf32> to vector<8x128xf32>
    %8 = arith.addf %5, %7 : vector<8x128xf32>
    %cst_6 = arith.constant 0.000000e+00 : f32
    %9 = vector.broadcast %cst_6 : f32 to vector<8x128xf32>
    %10 = arith.maximumf %8, %9 : vector<8x128xf32>
    %11 = arith.truncf %10 : vector<8x128xf32> to vector<8x128xbf16>
    %c0_7 = arith.constant 0 : index
    %c0_8 = arith.constant 0 : index
    %12 = vector.load %arg4[%c0_7, %c0_8] : memref<128x128xbf16, #tpu.memory_space<vmem>>, vector<128x128xbf16>
    %cst_9 = arith.constant dense<0.000000e+00> : vector<8x128xf32>
    %13 = tpu.matmul %11, %12, %cst_9 {dimension_numbers = #tpu.dot_dimension_numbers<[1], [0], [0], [1], [0, 0, 1, 1], [], []>} : vector<8x128xbf16>, vector<128x128xbf16>, vector<8x128xf32> -> vector<8x128xf32>
    %c0_10 = arith.constant 0 : index
    %c0_11 = arith.constant 0 : index
    %14 = vector.load %arg5[%c0_10, %c0_11] : memref<1x128xf32, #tpu.memory_space<vmem>>, vector<1x128xf32>
    %15 = vector.broadcast %14 : vector<1x128xf32> to vector<8x128xf32>
    %16 = arith.addf %13, %15 : vector<8x128xf32>
    %cst_12 = arith.constant 0.000000e+00 : f32
    %17 = vector.broadcast %cst_12 : f32 to vector<8x128xf32>
    %18 = arith.maximumf %16, %17 : vector<8x128xf32>
    %19 = arith.truncf %18 : vector<8x128xf32> to vector<8x128xbf16>
    %c0_13 = arith.constant 0 : index
    %c0_14 = arith.constant 0 : index
    %20 = vector.load %arg6[%c0_13, %c0_14] : memref<128x128xbf16, #tpu.memory_space<vmem>>, vector<128x128xbf16>
    %cst_15 = arith.constant dense<0.000000e+00> : vector<8x128xf32>
    %21 = tpu.matmul %19, %20, %cst_15 {dimension_numbers = #tpu.dot_dimension_numbers<[1], [0], [0], [1], [0, 0, 1, 1], [], []>} : vector<8x128xbf16>, vector<128x128xbf16>, vector<8x128xf32> -> vector<8x128xf32>
    %c0_16 = arith.constant 0 : index
    %c0_17 = arith.constant 0 : index
    %22 = vector.load %arg7[%c0_16, %c0_17] : memref<1x128xf32, #tpu.memory_space<vmem>>, vector<1x128xf32>
    %23 = vector.broadcast %22 : vector<1x128xf32> to vector<8x128xf32>
    %24 = arith.addf %21, %23 : vector<8x128xf32>
    %cst_18 = arith.constant 0.000000e+00 : f32
    %25 = vector.broadcast %cst_18 : f32 to vector<8x128xf32>
    %26 = arith.maximumf %24, %25 : vector<8x128xf32>
    %c0_19 = arith.constant 0 : index
    %c0_20 = arith.constant 0 : index
    %27 = vector.load %arg8[%c0_19, %c0_20] : memref<1x128xf32, #tpu.memory_space<vmem>>, vector<1x128xf32>
    %28 = vector.broadcast %27 : vector<1x128xf32> to vector<8x128xf32>
    %29 = arith.addf %26, %28 : vector<8x128xf32>
    %cst_21 = arith.constant dense<0xFF800000> : vector<8xf32>
    %30 = vector.multi_reduction <maximumf>, %29, %cst_21 [1] : vector<8x128xf32> to vector<8xf32>
    %31 = vector.shape_cast %30 : vector<8xf32> to vector<8x1xf32>
    %32 = vector.broadcast %31 : vector<8x1xf32> to vector<8x128xf32>
    %33 = arith.subf %29, %32 : vector<8x128xf32>
    %34 = math.exp %33 : vector<8x128xf32>
    %cst_22 = arith.constant dense<0.000000e+00> : vector<8xf32>
    %35 = vector.multi_reduction <add>, %34, %cst_22 [1] : vector<8x128xf32> to vector<8xf32>
    %36 = vector.shape_cast %35 : vector<8xf32> to vector<8x1xf32>
    %37 = vector.extract_strided_slice %34 {offsets = [0, 0], sizes = [8, 7], strides = [1, 1]} : vector<8x128xf32> to vector<8x7xf32>
    %38 = vector.broadcast %36 : vector<8x1xf32> to vector<8x7xf32>
    %39 = arith.divf %37, %38 : vector<8x7xf32>
    %c0_23 = arith.constant 0 : index
    %c0_24 = arith.constant 0 : index
    %40 = vector.load %arg9[%c0_23, %c0_24] : memref<8x7xf32, #tpu.memory_space<vmem>>, vector<8x7xf32>
    tpu.vector_store %arg9[%c0_23, %c0_24], %39 {strides = array<i32>} : memref<8x7xf32, #tpu.memory_space<vmem>>, vector<8x7xf32>,
    return
  }
  func.func @transform_0(%arg0: i32) -> (i32, i32) {
    %c0_i32 = arith.constant 0 : i32
    %c0_i32_0 = arith.constant 0 : i32
    return %arg0, %c0_i32 : i32, i32
  }
  func.func @transform_1(%arg0: i32) -> (i32, i32) {
    %c0_i32 = arith.constant 0 : i32
    %c0_i32_0 = arith.constant 0 : i32
    %c0_i32_1 = arith.constant 0 : i32
    return %c0_i32, %c0_i32_0 : i32, i32
  }
  func.func @transform_2(%arg0: i32) -> (i32, i32) {
    %c0_i32 = arith.constant 0 : i32
    %c0_i32_0 = arith.constant 0 : i32
    %c0_i32_1 = arith.constant 0 : i32
    return %c0_i32, %c0_i32_0 : i32, i32
  }
  func.func @transform_3(%arg0: i32) -> (i32, i32) {
    %c0_i32 = arith.constant 0 : i32
    %c0_i32_0 = arith.constant 0 : i32
    %c0_i32_1 = arith.constant 0 : i32
    return %c0_i32, %c0_i32_0 : i32, i32
  }
  func.func @transform_4(%arg0: i32) -> (i32, i32) {
    %c0_i32 = arith.constant 0 : i32
    %c0_i32_0 = arith.constant 0 : i32
    %c0_i32_1 = arith.constant 0 : i32
    return %c0_i32, %c0_i32_0 : i32, i32
  }
  func.func @transform_5(%arg0: i32) -> (i32, i32) {
    %c0_i32 = arith.constant 0 : i32
    %c0_i32_0 = arith.constant 0 : i32
    %c0_i32_1 = arith.constant 0 : i32
    return %c0_i32, %c0_i32_0 : i32, i32
  }
  func.func @transform_6(%arg0: i32) -> (i32, i32) {
    %c0_i32 = arith.constant 0 : i32
    %c0_i32_0 = arith.constant 0 : i32
    %c0_i32_1 = arith.constant 0 : i32
    return %c0_i32, %c0_i32_0 : i32, i32
  }
  func.func @transform_7(%arg0: i32) -> (i32, i32) {
    %c0_i32 = arith.constant 0 : i32
    %c0_i32_0 = arith.constant 0 : i32
    %c0_i32_1 = arith.constant 0 : i32
    return %c0_i32, %c0_i32_0 : i32, i32
  }
  func.func @transform_8(%arg0: i32) -> (i32, i32) {
    %c0_i32 = arith.constant 0 : i32
    %c0_i32_0 = arith.constant 0 : i32
    return %arg0, %c0_i32 : i32, i32
  }
}

</mosaic_0001>

<llo_original>
// kernel: tpu_custom_call.1
$region0: #{tpu_custom_call.1}
  #allocation0 [shape = 'u32[]', space=smem, size = 0x4, offset = 0x4, fixed_abs, tag = 'smem constant byte address 0x4 - core index']
  #allocation1 [shape = 'u32[144,128]{1,0:T(1,128)}', space=vmem, size = 0x12000, scoped, tag = 'internal scratch']
  %s0 = inlined_call_operand.hbm [shape: f32[8,7], index: 0, kind: input, shape index: {}]
  %s1 = inlined_call_operand.hbm [shape: bf16[128,128], index: 1, kind: input, shape index: {}]
  %s2 = inlined_call_operand.vmem [shape: f32[1,128], index: 2, kind: input, shape index: {}]
  %s3 = inlined_call_operand.hbm [shape: bf16[128,128], index: 3, kind: input, shape index: {}]
  %s4 = inlined_call_operand.vmem [shape: f32[1,128], index: 4, kind: input, shape index: {}]
  %s5 = inlined_call_operand.hbm [shape: bf16[128,128], index: 5, kind: input, shape index: {}]
  %s6 = inlined_call_operand.vmem [shape: f32[1,128], index: 6, kind: input, shape index: {}]
  %s7 = inlined_call_operand.vmem [shape: f32[1,128], index: 7, kind: input, shape index: {}]
  %s8 = inlined_call_operand.hbm [shape: f32[8,7], index: 8, kind: output, shape index: {}]
  %s9 = sld [smem:[#allocation0]]
  $region58: #{tpu_custom_call.1} parent=0
    _
  %s11 = ssub.s32 1, %s9
  %s12 = scalar_select 0, %s11, %s9
  $region1: #{tpu_custom_call.1} parent=0
    #allocation2 [shape = 'u8[4096]{0}', space=vmem, size = 0x1000, scoped, tag = 'input window, operand 0, single buffered']
    #allocation3 [shape = 's32[1]{0}', space=sflag, size = 0x4, scoped, tag = 'scoped memory for tpu_custom_call.1']
    #allocation4 [shape = 's32[1]{0}', space=sflag, size = 0x4, scoped, tag = 'scoped memory for tpu_custom_call.1']
    #allocation5 [shape = 'u8[32768]{0}', space=vmem, size = 0x8000, scoped, tag = 'input window, operand 1, single buffered']
    #allocation6 [shape = 's32[1]{0}', space=sflag, size = 0x4, scoped, tag = 'scoped memory for tpu_custom_call.1']
    #allocation7 [shape = 'u8[32768]{0}', space=vmem, size = 0x8000, scoped, tag = 'input window, operand 3, single buffered']
    #allocation8 [shape = 'u8[32768]{0}', space=vmem, size = 0x8000, scoped, tag = 'input window, operand 5, single buffered']
    #allocation9 [shape = 's32[1]{0}', space=sflag, size = 0x4, scoped, tag = 'scoped memory for tpu_custom_call.1']
    #allocation10 [shape = 'u8[4096]{0}', space=vmem, size = 0x1000, scoped, tag = 'output window, operand 0, single buffered']
    %13 = vsyncpa [#allocation3], 0
    %14 = vsyncpa [#allocation6], 0
    %15 = vsyncpa [#allocation9], 0
    %16 = vsyncpa [#allocation4], 0
    // Predicated region
    $region2: #{tpu_custom_call.1} parent=1 // pred_check
      _
    $region3: #{tpu_custom_call.1} parent=1 // pred_check_branch
      %18 = sbr.rel (0) target = $region5
    $region4: #{tpu_custom_call.1} parent=1 // pred_region
      %s20 = ssub.s32 128, 128
      %21 = vsyncadd [#allocation3], %s20
      %s23 = sshll.u32 [#allocation2], 4
      %s24 = int_to_ptr.vmem [resolvable:$true] %s23
      %26 = dma.hbm_to_vmem [thread:$0]  %s0, 128, %s24, [#allocation3]
    $region5: #{tpu_custom_call.1} parent=1 // pred_fallthru
      _
    // Predicated region
    $region6: #{tpu_custom_call.1} parent=1 // pred_check
      _
    $region7: #{tpu_custom_call.1} parent=1 // pred_check_branch
      %28 = sbr.rel (0) target = $region9
    $region8: #{tpu_custom_call.1} parent=1 // pred_region
      %s30 = ssub.s32 1024, 1024
      %31 = vsyncadd [#allocation6], %s30
      %s32 = sshll.u32 [#allocation5], 4
      %s33 = int_to_ptr.vmem [resolvable:$true] %s32
      %38 = dma.hbm_to_vmem [thread:$0]  %s1, 1024, %s33, [#allocation6], 64, 64, 4
    $region9: #{tpu_custom_call.1} parent=1 // pred_fallthru
      _
    // Predicated region
    $region10: #{tpu_custom_call.1} parent=1 // pred_check
      _
    $region11: #{tpu_custom_call.1} parent=1 // pred_check_branch
      %40 = sbr.rel (0) target = $region13
    $region12: #{tpu_custom_call.1} parent=1 // pred_region
      _
    $region13: #{tpu_custom_call.1} parent=1 // pred_fallthru
      _
    // Predicated region
    $region14: #{tpu_custom_call.1} parent=1 // pred_check
      _
    $region15: #{tpu_custom_call.1} parent=1 // pred_check_branch
      %42 = sbr.rel (0) target = $region17
    $region16: #{tpu_custom_call.1} parent=1 // pred_region
      %s44 = ssub.s32 1024, 1024
      %45 = vsyncadd [#allocation6], %s44
      %s46 = sshll.u32 [#allocation7], 4
      %s47 = int_to_ptr.vmem [resolvable:$true] %s46
      %52 = dma.hbm_to_vmem [thread:$0]  %s3, 1024, %s47, [#allocation6], 64, 64, 4
    $region17: #{tpu_custom_call.1} parent=1 // pred_fallthru
      _
    // Predicated region
    $region18: #{tpu_custom_call.1} parent=1 // pred_check
      _
    $region19: #{tpu_custom_call.1} parent=1 // pred_check_branch
      %54 = sbr.rel (0) target = $region21
    $region20: #{tpu_custom_call.1} parent=1 // pred_region
      _
    $region21: #{tpu_custom_call.1} parent=1 // pred_fallthru
      _
    // Predicated region
    $region22: #{tpu_custom_call.1} parent=1 // pred_check
      _
    $region23: #{tpu_custom_call.1} parent=1 // pred_check_branch
      %56 = sbr.rel (0) target = $region25
    $region24: #{tpu_custom_call.1} parent=1 // pred_region
      %s58 = ssub.s32 1024, 1024
      %59 = vsyncadd [#allocation9], %s58
      %s60 = sshll.u32 [#allocation8], 4
      %s61 = int_to_ptr.vmem [resolvable:$true] %s60
      %66 = dma.hbm_to_vmem [thread:$0]  %s5, 1024, %s61, [#allocation9], 64, 64, 4
    $region25: #{tpu_custom_call.1} parent=1 // pred_fallthru
      _
    // Predicated region
    $region26: #{tpu_custom_call.1} parent=1 // pred_check
      _
    $region27: #{tpu_custom_call.1} parent=1 // pred_check_branch
      %68 = sbr.rel (0) target = $region29
    $region28: #{tpu_custom_call.1} parent=1 // pred_region
      _
    $region29: #{tpu_custom_call.1} parent=1 // pred_fallthru
      _
    // Predicated region
    $region30: #{tpu_custom_call.1} parent=1 // pred_check
      _
    $region31: #{tpu_custom_call.1} parent=1 // pred_check_branch
      %70 = sbr.rel (0) target = $region33
    $region32: #{tpu_custom_call.1} parent=1 // pred_region
      _
    $region33: #{tpu_custom_call.1} parent=1 // pred_fallthru
      _
    // Predicated region
    $region34: #{tpu_custom_call.1} parent=1 // pred_check
      _
    $region35: #{tpu_custom_call.1} parent=1 // pred_check_branch
      %72 = sbr.rel (0) target = $region37
    $region36: #{tpu_custom_call.1} parent=1 // pred_region
      %73 = dma.done [#allocation3], 128
    $region37: #{tpu_custom_call.1} parent=1 // pred_fallthru
      _
    // Predicated region
    $region38: #{tpu_custom_call.1} parent=1 // pred_check
      _
    $region39: #{tpu_custom_call.1} parent=1 // pred_check_branch
      %75 = sbr.rel (0) target = $region41
    $region40: #{tpu_custom_call.1} parent=1 // pred_region
      %76 = dma.done [#allocation6], 1024
    $region41: #{tpu_custom_call.1} parent=1 // pred_fallthru
      _
    // Predicated region
    $region42: #{tpu_custom_call.1} parent=1 // pred_check
      _
    $region43: #{tpu_custom_call.1} parent=1 // pred_check_branch
      %78 = sbr.rel (0) target = $region45
    $region44: #{tpu_custom_call.1} parent=1 // pred_region
      %79 = dma.done [#allocation6], 1024
    $region45: #{tpu_custom_call.1} parent=1 // pred_fallthru
      _
    // Predicated region
    $region46: #{tpu_custom_call.1} parent=1 // pred_check
      _
    $region47: #{tpu_custom_call.1} parent=1 // pred_check_branch
      %81 = sbr.rel (0) target = $region49
    $region48: #{tpu_custom_call.1} parent=1 // pred_region
      %82 = dma.done [#allocation9], 1024
    $region49: #{tpu_custom_call.1} parent=1 // pred_fallthru
      _
    %v84 = vld [vmem:[#allocation2] sm:$0xff]
    %vm85 = vcmask 56320
    %v86 = vsel %vm85, %v84, 0.0
    %v87 = vpack.c.bf16 %v86, %v86
    %v88 = vld [vmem:[#allocation5] sm:$0xf]
    %v89 = vld [vmem:[#allocation5 + $0x4] sm:$0xf]
    %v90 = vld [vmem:[#allocation5 + $0x8] sm:$0xf]
    %v91 = vld [vmem:[#allocation5 + $0xc] sm:$0xf]
    %v92 = vld [vmem:[#allocation5 + $0x10] sm:$0xf]
    %v93 = vld [vmem:[#allocation5 + $0x14] sm:$0xf]
    %v94 = vld [vmem:[#allocation5 + $0x18] sm:$0xf]
    %v95 = vld [vmem:[#allocation5 + $0x1c] sm:$0xf]
    %v96 = vld [vmem:[#allocation5 + $0x20] sm:$0xf]
    %v97 = vld [vmem:[#allocation5 + $0x24] sm:$0xf]
    %v98 = vld [vmem:[#allocation5 + $0x28] sm:$0xf]
    %v99 = vld [vmem:[#allocation5 + $0x2c] sm:$0xf]
    %v100 = vld [vmem:[#allocation5 + $0x30] sm:$0xf]
    %v101 = vld [vmem:[#allocation5 + $0x34] sm:$0xf]
    %v102 = vld [vmem:[#allocation5 + $0x38] sm:$0xf]
    %v103 = vld [vmem:[#allocation5 + $0x3c] sm:$0xf]
    %v104 = vld [vmem:[%s2] sm:$0x1]
    %v106 = vlaneseq
    %v107 = vshrl.u32 %v106, 7
    %v108 = vsub.s32 0, %v107
    %v109 = vrot.slane %v104, %v108
    %v127 = vunpack.c.l.b16 %v88
    %v128 = vunpack.c.l.b16 %v89
    %v129 = vunpack.c.l.b16 %v90
    %v130 = vunpack.c.l.b16 %v91
    %v131 = vunpack.c.l.b16 %v92
    %v132 = vunpack.c.l.b16 %v93
    %v133 = vunpack.c.l.b16 %v94
    %v134 = vunpack.c.l.b16 %v95
    %v135 = vunpack.c.l.b16 %v96
    %v136 = vunpack.c.l.b16 %v97
    %v137 = vunpack.c.l.b16 %v98
    %v138 = vunpack.c.l.b16 %v99
    %v139 = vunpack.c.l.b16 %v100
    %v140 = vunpack.c.l.b16 %v101
    %v141 = vunpack.c.l.b16 %v102
    %v142 = vunpack.c.l.b16 %v103
    %v143 = vpack.c.b16 %v128, %v127
    %v144 = vpack.c.b16 %v130, %v129
    %v145 = vpack.c.b16 %v132, %v131
    %v146 = vpack.c.b16 %v134, %v133
    %v147 = vpack.c.b16 %v136, %v135
    %v148 = vpack.c.b16 %v138, %v137
    %v149 = vpack.c.b16 %v140, %v139
    %v150 = vpack.c.b16 %v142, %v141
    %159 = vmatprep.subr.bf16.mxu0 0
    %160 = vmatpush1.bf16.msra.mxu0 %v143
    %161 = vmatprep.subr.bf16.mxu0 0
    %162 = vmatpush1.bf16.msra.mxu0 %v144
    %163 = vmatprep.subr.bf16.mxu0 0
    %164 = vmatpush1.bf16.msra.mxu0 %v145
    %165 = vmatprep.subr.bf16.mxu0 0
    %166 = vmatpush1.bf16.msra.mxu0 %v146
    %167 = vmatprep.subr.bf16.mxu0 0
    %168 = vmatpush1.bf16.msra.mxu0 %v147
    %169 = vmatprep.subr.bf16.mxu0 0
    %170 = vmatpush1.bf16.msra.mxu0 %v148
    %171 = vmatprep.subr.bf16.mxu0 0
    %172 = vmatpush1.bf16.msra.mxu0 %v149
    %173 = vmatprep.subr.bf16.mxu0 0
    %174 = vmatpush1.bf16.msra.mxu0 %v150
    %175 = vmatprep.subr.bf16.mxu0 0
    %176 = vmatpush1.bf16.msra.mxu0 0
    %177 = vmatprep.subr.bf16.mxu0 0
    %178 = vmatpush1.bf16.msra.mxu0 0
    %179 = vmatprep.subr.bf16.mxu0 0
    %180 = vmatpush1.bf16.msra.mxu0 0
    %181 = vmatprep.subr.bf16.mxu0 0
    %182 = vmatpush1.bf16.msra.mxu0 0
    %183 = vmatprep.subr.bf16.mxu0 0
    %184 = vmatpush1.bf16.msra.mxu0 0
    %185 = vmatprep.subr.bf16.mxu0 0
    %186 = vmatpush1.bf16.msra.mxu0 0
    %187 = vmatprep.subr.bf16.mxu0 0
    %188 = vmatpush1.bf16.msra.mxu0 0
    %189 = vmatprep.subr.bf16.mxu0 0
    %190 = vmatpush1.bf16.msra.mxu0 0
    %191 = vmatprep.mubr.bf16.mxu0 0
    %192 = vmatmul.mubr.bf16.gmra.mrb[0].mxu0 %v87
    %v193 = vpop.f32.mrb[0].mxu0
    %v194 = vadd.f32 %v109, %v193
    %v195 = vpop.f32.mrb[0].mxu0
    %v196 = vpop.f32.mrb[0].mxu0
    %v197 = vpop.f32.mrb[0].mxu0
    %198 = vdwg.mxu0
    %v199 = vmax.f32 %v194, 0.0
    %v200 = vpack.c.bf16 %v199, %v199
    %v201 = vld [vmem:[#allocation7] sm:$0xf]
    %v202 = vld [vmem:[#allocation7 + $0x4] sm:$0xf]
    %v203 = vld [vmem:[#allocation7 + $0x8] sm:$0xf]
    %v204 = vld [vmem:[#allocation7 + $0xc] sm:$0xf]
    %v205 = vld [vmem:[#allocation7 + $0x10] sm:$0xf]
    %v206 = vld [vmem:[#allocation7 + $0x14] sm:$0xf]
    %v207 = vld [vmem:[#allocation7 + $0x18] sm:$0xf]
    %v208 = vld [vmem:[#allocation7 + $0x1c] sm:$0xf]
    %v209 = vld [vmem:[#allocation7 + $0x20] sm:$0xf]
    %v210 = vld [vmem:[#allocation7 + $0x24] sm:$0xf]
    %v211 = vld [vmem:[#allocation7 + $0x28] sm:$0xf]
    %v212 = vld [vmem:[#allocation7 + $0x2c] sm:$0xf]
    %v213 = vld [vmem:[#allocation7 + $0x30] sm:$0xf]
    %v214 = vld [vmem:[#allocation7 + $0x34] sm:$0xf]
    %v215 = vld [vmem:[#allocation7 + $0x38] sm:$0xf]
    %v216 = vld [vmem:[#allocation7 + $0x3c] sm:$0xf]
    %v217 = vld [vmem:[%s4] sm:$0x1]
    %v219 = vlaneseq
    %v220 = vshrl.u32 %v219, 7
    %v221 = vsub.s32 0, %v220
    %v222 = vrot.slane %v217, %v221
    %v240 = vunpack.c.l.b16 %v201
    %v241 = vunpack.c.l.b16 %v202
    %v242 = vunpack.c.l.b16 %v203
    %v243 = vunpack.c.l.b16 %v204
    %v244 = vunpack.c.l.b16 %v205
    %v245 = vunpack.c.l.b16 %v206
    %v246 = vunpack.c.l.b16 %v207
    %v247 = vunpack.c.l.b16 %v208
    %v248 = vunpack.c.l.b16 %v209
    %v249 = vunpack.c.l.b16 %v210
    %v250 = vunpack.c.l.b16 %v211
    %v251 = vunpack.c.l.b16 %v212
    %v252 = vunpack.c.l.b16 %v213
    %v253 = vunpack.c.l.b16 %v214
    %v254 = vunpack.c.l.b16 %v215
    %v255 = vunpack.c.l.b16 %v216
    %v256 = vpack.c.b16 %v241, %v240
    %v257 = vpack.c.b16 %v243, %v242
    %v258 = vpack.c.b16 %v245, %v244
    %v259 = vpack.c.b16 %v247, %v246
    %v260 = vpack.c.b16 %v249, %v248
    %v261 = vpack.c.b16 %v251, %v250
    %v262 = vpack.c.b16 %v253, %v252
    %v263 = vpack.c.b16 %v255, %v254
    %272 = vmatprep.subr.bf16.mxu0 0
    %273 = vmatpush1.bf16.msra.mxu0 %v256
    %274 = vmatprep.subr.bf16.mxu0 0
    %275 = vmatpush1.bf16.msra.mxu0 %v257
    %276 = vmatprep.subr.bf16.mxu0 0
    %277 = vmatpush1.bf16.msra.mxu0 %v258
    %278 = vmatprep.subr.bf16.mxu0 0
    %279 = vmatpush1.bf16.msra.mxu0 %v259
    %280 = vmatprep.subr.bf16.mxu0 0
    %281 = vmatpush1.bf16.msra.mxu0 %v260
    %282 = vmatprep.subr.bf16.mxu0 0
    %283 = vmatpush1.bf16.msra.mxu0 %v261
    %284 = vmatprep.subr.bf16.mxu0 0
    %285 = vmatpush1.bf16.msra.mxu0 %v262
    %286 = vmatprep.subr.bf16.mxu0 0
    %287 = vmatpush1.bf16.msra.mxu0 %v263
    %288 = vmatprep.subr.bf16.mxu0 0
    %289 = vmatpush1.bf16.msra.mxu0 0
    %290 = vmatprep.subr.bf16.mxu0 0
    %291 = vmatpush1.bf16.msra.mxu0 0
    %292 = vmatprep.subr.bf16.mxu0 0
    %293 = vmatpush1.bf16.msra.mxu0 0
    %294 = vmatprep.subr.bf16.mxu0 0
    %295 = vmatpush1.bf16.msra.mxu0 0
    %296 = vmatprep.subr.bf16.mxu0 0
    %297 = vmatpush1.bf16.msra.mxu0 0
    %298 = vmatprep.subr.bf16.mxu0 0
    %299 = vmatpush1.bf16.msra.mxu0 0
    %300 = vmatprep.subr.bf16.mxu0 0
    %301 = vmatpush1.bf16.msra.mxu0 0
    %302 = vmatprep.subr.bf16.mxu0 0
    %303 = vmatpush1.bf16.msra.mxu0 0
    %304 = vmatprep.mubr.bf16.mxu0 0
    %305 = vmatmul.mubr.bf16.gmra.mrb[0].mxu0 %v200
    %v306 = vpop.f32.mrb[0].mxu0
    %v307 = vadd.f32 %v222, %v306
    %v308 = vpop.f32.mrb[0].mxu0
    %v309 = vpop.f32.mrb[0].mxu0
    %v310 = vpop.f32.mrb[0].mxu0
    %311 = vdwg.mxu0
    %v312 = vmax.f32 %v307, 0.0
    %v313 = vpack.c.bf16 %v312, %v312
    %v314 = vld [vmem:[#allocation8] sm:$0xf]
    %v315 = vld [vmem:[#allocation8 + $0x4] sm:$0xf]
    %v316 = vld [vmem:[#allocation8 + $0x8] sm:$0xf]
    %v317 = vld [vmem:[#allocation8 + $0xc] sm:$0xf]
    %v318 = vld [vmem:[#allocation8 + $0x10] sm:$0xf]
    %v319 = vld [vmem:[#allocation8 + $0x14] sm:$0xf]
    %v320 = vld [vmem:[#allocation8 + $0x18] sm:$0xf]
    %v321 = vld [vmem:[#allocation8 + $0x1c] sm:$0xf]
    %v322 = vld [vmem:[#allocation8 + $0x20] sm:$0xf]
    %v323 = vld [vmem:[#allocation8 + $0x24] sm:$0xf]
    %v324 = vld [vmem:[#allocation8 + $0x28] sm:$0xf]
    %v325 = vld [vmem:[#allocation8 + $0x2c] sm:$0xf]
    %v326 = vld [vmem:[#allocation8 + $0x30] sm:$0xf]
    %v327 = vld [vmem:[#allocation8 + $0x34] sm:$0xf]
    %v328 = vld [vmem:[#allocation8 + $0x38] sm:$0xf]
    %v329 = vld [vmem:[#allocation8 + $0x3c] sm:$0xf]
    %v330 = vld [vmem:[%s6] sm:$0x1]
    %v332 = vlaneseq
    %v333 = vshrl.u32 %v332, 7
    %v334 = vsub.s32 0, %v333
    %v335 = vrot.slane %v330, %v334
    %v353 = vunpack.c.l.b16 %v314
    %v354 = vunpack.c.l.b16 %v315
    %v355 = vunpack.c.l.b16 %v316
    %v356 = vunpack.c.l.b16 %v317
    %v357 = vunpack.c.l.b16 %v318
    %v358 = vunpack.c.l.b16 %v319
    %v359 = vunpack.c.l.b16 %v320
    %v360 = vunpack.c.l.b16 %v321
    %v361 = vunpack.c.l.b16 %v322
    %v362 = vunpack.c.l.b16 %v323
    %v363 = vunpack.c.l.b16 %v324
    %v364 = vunpack.c.l.b16 %v325
    %v365 = vunpack.c.l.b16 %v326
    %v366 = vunpack.c.l.b16 %v327
    %v367 = vunpack.c.l.b16 %v328
    %v368 = vunpack.c.l.b16 %v329
    %v369 = vpack.c.b16 %v354, %v353
    %v370 = vpack.c.b16 %v356, %v355
    %v371 = vpack.c.b16 %v358, %v357
    %v372 = vpack.c.b16 %v360, %v359
    %v373 = vpack.c.b16 %v362, %v361
    %v374 = vpack.c.b16 %v364, %v363
    %v375 = vpack.c.b16 %v366, %v365
    %v376 = vpack.c.b16 %v368, %v367
    %385 = vmatprep.subr.bf16.mxu0 0
    %386 = vmatpush1.bf16.msra.mxu0 %v369
    %387 = vmatprep.subr.bf16.mxu0 0
    %388 = vmatpush1.bf16.msra.mxu0 %v370
    %389 = vmatprep.subr.bf16.mxu0 0
    %390 = vmatpush1.bf16.msra.mxu0 %v371
    %391 = vmatprep.subr.bf16.mxu0 0
    %392 = vmatpush1.bf16.msra.mxu0 %v372
    %393 = vmatprep.subr.bf16.mxu0 0
    %394 = vmatpush1.bf16.msra.mxu0 %v373
    %395 = vmatprep.subr.bf16.mxu0 0
    %396 = vmatpush1.bf16.msra.mxu0 %v374
    %397 = vmatprep.subr.bf16.mxu0 0
    %398 = vmatpush1.bf16.msra.mxu0 %v375
    %399 = vmatprep.subr.bf16.mxu0 0
    %400 = vmatpush1.bf16.msra.mxu0 %v376
    %401 = vmatprep.subr.bf16.mxu0 0
    %402 = vmatpush1.bf16.msra.mxu0 0
    %403 = vmatprep.subr.bf16.mxu0 0
    %404 = vmatpush1.bf16.msra.mxu0 0
    %405 = vmatprep.subr.bf16.mxu0 0
    %406 = vmatpush1.bf16.msra.mxu0 0
    %407 = vmatprep.subr.bf16.mxu0 0
    %408 = vmatpush1.bf16.msra.mxu0 0
    %409 = vmatprep.subr.bf16.mxu0 0
    %410 = vmatpush1.bf16.msra.mxu0 0
    %411 = vmatprep.subr.bf16.mxu0 0
    %412 = vmatpush1.bf16.msra.mxu0 0
    %413 = vmatprep.subr.bf16.mxu0 0
    %414 = vmatpush1.bf16.msra.mxu0 0
    %415 = vmatprep.subr.bf16.mxu0 0
    %416 = vmatpush1.bf16.msra.mxu0 0
    %417 = vmatprep.mubr.bf16.mxu0 0
    %418 = vmatmul.mubr.bf16.gmra.mrb[0].mxu0 %v313
    %v419 = vpop.f32.mrb[0].mxu0
    %v420 = vadd.f32 %v335, %v419
    %v421 = vpop.f32.mrb[0].mxu0
    %v422 = vpop.f32.mrb[0].mxu0
    %v423 = vpop.f32.mrb[0].mxu0
    %424 = vdwg.mxu0
    %v425 = vmax.f32 %v420, 0.0
    %v426 = vld [vmem:[%s7] sm:$0x1]
    %v428 = vlaneseq
    %v429 = vshrl.u32 %v428, 7
    %v430 = vsub.s32 0, %v429
    %v431 = vrot.slane %v426, %v430
    %v433 = vadd.f32 %v425, %v431
    %434 = vmax.xlane.f32.xlu0 %v433
    %v435 = vpop.xlane.xlu0 %434
    %v436 = vsub.f32 %v433, %v435
    %v437 = vmul.f32 %v436, 1.442695
    %v438 = vpow.pop %v437
    %439 = vadd.xlane.f32.xlu0 %v438
    %v440 = vpop.xlane.xlu0 %439
    %v441 = vrcp.pop %v440
    %v442 = vmul.f32 %v438, %v441
    %443 = vst.msk [vmem:[#allocation10] sm:$0xff] %vm85, %v442
    // Predicated region
    $region50: #{tpu_custom_call.1} parent=1 // pred_check
      _
    $region51: #{tpu_custom_call.1} parent=1 // pred_check_branch
      %445 = sbr.rel (0) target = $region53
    $region52: #{tpu_custom_call.1} parent=1 // pred_region
      %s447 = ssub.s32 128, 128
      %448 = vsyncadd [#allocation4], %s447
      %s450 = sshll.u32 [#allocation10], 4
      %s451 = int_to_ptr.vmem [resolvable:$true] %s450
      %453 = dma.vmem_to_hbm [thread:$0]  %s451, 128, %s8, [#allocation4]
    $region53: #{tpu_custom_call.1} parent=1 // pred_fallthru
      _
    // Predicated region
    $region54: #{tpu_custom_call.1} parent=1 // pred_check
      _
    $region55: #{tpu_custom_call.1} parent=1 // pred_check_branch
      %455 = sbr.rel (0) target = $region57
    $region56: #{tpu_custom_call.1} parent=1 // pred_region
      %456 = dma.done [#allocation4], 128
    $region57: #{tpu_custom_call.1} parent=1 // pred_fallthru
      _
    %457 = vsyncpa [#allocation3], 1
    %458 = vsyncpa [#allocation6], 1
    %459 = vsyncpa [#allocation9], 1
    %460 = vsyncpa [#allocation4], 1

</llo_original>
